<compile_context>
chip_gen: v7x
topology: tpu7x:2x2x1
jax: 0.10.0
libtpu: 0.0.40
codegen_flags: <defaults>
</compile_context>

<pallas_src>
import functools

import jax
import jax.numpy as jnp
from jax.experimental import pallas as pl
from jax.experimental.pallas import tpu as pltpu


def _pcb_activ_kernel(w_ref, x_ref, o_ref, xp_ref, *, H, W, K, pad, m, cbi,
                      neg_slope):
    """One (batch, input-channel-block) tile.

    w_ref  : SMEM (C_out*K*K,) f32  -- full weight-normalized weights
    x_ref  : VMEM (1, cbi, H, W)    -- unpadded input channel block
    o_ref  : VMEM (1, cbi*m, H, W)  -- output channel block
    xp_ref : VMEM (cbi, H+2p, W+2p) f32 scratch -- zero halo built in-kernel
    """
    j = pl.program_id(1)  # input-channel block index

    # Build the zero-padded input block in VMEM (replaces the old jnp.pad
    # prepass which read+wrote a full padded copy of x through HBM).
    xp_ref[...] = jnp.zeros_like(xp_ref)
    xp_ref[:, pad:pad + H, pad:pad + W] = x_ref[0].astype(jnp.float32)

    kk = K * K
    for ci in range(cbi):               # static unroll over channels in block
        for r in range(m):              # outputs per depthwise group
            # Global output channel for this (input channel, replica).
            co = (j * cbi + ci) * m + r
            wbase = co * kk
            # f32 accumulation (safe on v5e; inputs here are f32 anyway).
            acc = jnp.zeros((H, W), jnp.float32)
            # K*K conv taps: scalar weight from SMEM x shifted VMEM window.
            for kh in range(K):
                for kw in range(K):
                    w_s = w_ref[wbase + kh * K + kw]
                    acc = acc + w_s * xp_ref[ci, kh:kh + H, kw:kw + W]
            # LeakyReLU(negative_slope=0.2); conv_bias=False -> no bias.
            out = jnp.where(acc > 0, acc, neg_slope * acc)
            o_ref[0, ci * m + r] = out.astype(o_ref.dtype)


def pcb_activ_forward(x, weight, *, padding=1, neg_slope=0.2, max_cbi=16):
    """x: (N, C_in, H, W), weight: (C_out, K, K) depthwise-grouped weights.

    Returns LeakyReLU(grouped_conv2d(x, weight, stride=1, pad=padding)).
    """
    N, C_in, H, W = x.shape
    C_out, K, _ = weight.shape
    assert C_out % C_in == 0, "grouped conv requires out_ch % in_ch == 0"
    # The kernel assumes a 'same'-size output (as in PCBActiv's 3/5/7 configs).
    assert 2 * padding == K - 1, "kernel assumes 2*padding == K-1 ('same')"
    m = C_out // C_in                    # outputs per depthwise group
    Hp, Wp = H + 2 * padding, W + 2 * padding

    # Channel-block size: largest divisor of C_in that keeps the
    # (double-buffered) input+output blocks + scratch well under the scoped
    # VMEM default on all generations (v7x has only 64 MiB physical VMEM).
    itemsize = x.dtype.itemsize
    per_ch_bytes = 2 * (H * W * itemsize + m * H * W * itemsize) + Hp * Wp * 4
    budget = 8 * 1024 * 1024
    limit = max(1, min(C_in, max_cbi, budget // max(per_ch_bytes, 1)))
    cbi = 1
    for d in range(1, limit + 1):
        if C_in % d == 0:
            cbi = d
    cbo = cbi * m

    # Flatten weights to 1D so the SMEM copy pads to next_pow2(4*C_out*K*K)
    # bytes instead of a (rows, 128)-word slab.
    w_flat = weight.reshape(C_out * K * K).astype(jnp.float32)

    kernel = functools.partial(
        _pcb_activ_kernel, H=H, W=W, K=K, pad=padding, m=m, cbi=cbi,
        neg_slope=neg_slope)

    return pl.pallas_call(
        kernel,
        out_shape=jax.ShapeDtypeStruct((N, C_out, H, W), x.dtype),
        grid=(N, C_in // cbi),
        in_specs=[
            # Full weight tensor, resident in SMEM (no per-step weight DMA).
            pl.BlockSpec(memory_space=pltpu.MemorySpace.SMEM),
            # Unpadded input: one contiguous channel block, full spatial.
            pl.BlockSpec((1, cbi, H, W), lambda n, j: (n, j, 0, 0)),
        ],
        out_specs=pl.BlockSpec((1, cbo, H, W), lambda n, j: (n, j, 0, 0)),
        scratch_shapes=[pltpu.VMEM((cbi, Hp, Wp), jnp.float32)],
        compiler_params=pltpu.CompilerParams(
            dimension_semantics=("parallel", "parallel")),
    )(w_flat, x)


if __name__ == "__main__":
    key = jax.random.PRNGKey(0)
    N, C_in, C_out, H, W, K = 2, 4, 4, 16, 16, 3
    k_x, k_v, k_g = jax.random.split(key, 3)

    x = jax.random.normal(k_x, (N, C_in, H, W), jnp.float32)

    # Deterministic weight-norm parameterization (wn == weight_norm, dim=0):
    #   W = g * v / ||v||,  norm over (in/groups, kH, kW) per output channel.
    v = jax.random.normal(k_v, (C_out, 1, K, K), jnp.float32)
    g = jax.random.uniform(k_g, (C_out,), jnp.float32, minval=0.5, maxval=1.5)
    v_norm = jnp.sqrt(jnp.sum(v * v, axis=(1, 2, 3), keepdims=True))
    w_full = g[:, None, None, None] * v / v_norm          # (C_out, 1, K, K)
    weight = w_full[:, 0]                                  # (C_out, K, K)
    # conv_bias=False -> no bias term.

    y = pcb_activ_forward(x, weight)
    y = jax.block_until_ready(y)

    # Pure-JAX reference (grouped conv + leaky relu) for correctness check.
    y_ref = jax.lax.conv_general_dilated(
        x, w_full, window_strides=(1, 1), padding=((1, 1), (1, 1)),
        dimension_numbers=("NCHW", "OIHW", "NCHW"),
        feature_group_count=C_in)
    y_ref = jnp.where(y_ref > 0, y_ref, 0.2 * y_ref)
    assert y.shape == (N, C_out, H, W)
    assert jnp.allclose(y, y_ref, atol=1e-5, rtol=1e-5), "mismatch vs reference"

    print("KERNEL_OK")
</pallas_src>

<mosaic_0001>
module attributes {stable_mosaic.version = 11 : i64} {
  func.func @_pcb_activ_kernel(%arg0: i32, %arg1: i32, %arg2: memref<36xf32, #tpu.memory_space<smem>>, %arg3: memref<1x4x16x16xf32, #tpu.memory_space<vmem>>, %arg4: memref<1x4x16x16xf32, #tpu.memory_space<vmem>>, %arg5: memref<4x18x18xf32, #tpu.memory_space<vmem>>) attributes {dimension_semantics = [#tpu.dimension_semantics<parallel>, #tpu.dimension_semantics<parallel>], iteration_bounds = array<i64: 2, 1>, scalar_prefetch = 0 : i64, scratch_operands = 1 : i64, tpu.core_type = #tpu.core_type<tc>, window_params = [{transform_indices = @transform_0, window_bounds = array<i64: 36>}, {transform_indices = @transform_1, window_bounds = array<i64: 1, 4, 16, 16>}, {transform_indices = @transform_2, window_bounds = array<i64: 1, 4, 16, 16>}]} {
    %cst = arith.constant 0.000000e+00 : f32
    %0 = vector.broadcast %cst : f32 to vector<4x18x18xf32>
    %c0 = arith.constant 0 : index
    %c0_0 = arith.constant 0 : index
    %c0_1 = arith.constant 0 : index
    %1 = vector.load %arg5[%c0, %c0_0, %c0_1] : memref<4x18x18xf32, #tpu.memory_space<vmem>>, vector<4x18x18xf32>
    tpu.vector_store %arg5[%c0, %c0_0, %c0_1], %0 {strides = array<i32>} : memref<4x18x18xf32, #tpu.memory_space<vmem>>, vector<4x18x18xf32>,
    %c0_2 = arith.constant 0 : index
    %c0_3 = arith.constant 0 : index
    %c0_4 = arith.constant 0 : index
    %c0_5 = arith.constant 0 : index
    %2 = vector.load %arg3[%c0_2, %c0_3, %c0_4, %c0_5] : memref<1x4x16x16xf32, #tpu.memory_space<vmem>>, vector<1x4x16x16xf32>
    %3 = vector.shape_cast %2 : vector<1x4x16x16xf32> to vector<4x16x16xf32>
    %c0_6 = arith.constant 0 : index
    %c1 = arith.constant 1 : index
    %c1_7 = arith.constant 1 : index
    %4 = vector.load %arg5[%c0_6, %c1, %c1_7] : memref<4x18x18xf32, #tpu.memory_space<vmem>>, vector<4x16x16xf32>
    tpu.vector_store %arg5[%c0_6, %c1, %c1_7], %3 {strides = array<i32>} : memref<4x18x18xf32, #tpu.memory_space<vmem>>, vector<4x16x16xf32>,
    %c4_i32 = arith.constant 4 : i32
    %5 = arith.muli %arg1, %c4_i32 : i32
    %c0_i32 = arith.constant 0 : i32
    %6 = arith.addi %5, %c0_i32 : i32
    %c1_i32 = arith.constant 1 : i32
    %7 = arith.muli %6, %c1_i32 : i32
    %c0_i32_8 = arith.constant 0 : i32
    %8 = arith.addi %7, %c0_i32_8 : i32
    %c9_i32 = arith.constant 9 : i32
    %9 = arith.muli %8, %c9_i32 : i32
    %cst_9 = arith.constant 0.000000e+00 : f32
    %10 = vector.broadcast %cst_9 : f32 to vector<16x16xf32>
    %c0_i32_10 = arith.constant 0 : i32
    %11 = arith.addi %9, %c0_i32_10 : i32
    %c0_i32_11 = arith.constant 0 : i32
    %12 = arith.addi %11, %c0_i32_11 : i32
    %13 = arith.index_cast %12 : i32 to index
    %14 = memref.load %arg2[%13] : memref<36xf32, #tpu.memory_space<smem>>
    %c0_12 = arith.constant 0 : index
    %c0_13 = arith.constant 0 : index
    %c0_14 = arith.constant 0 : index
    %15 = vector.load %arg5[%c0_12, %c0_13, %c0_14] : memref<4x18x18xf32, #tpu.memory_space<vmem>>, vector<1x16x16xf32>
    %16 = vector.shape_cast %15 : vector<1x16x16xf32> to vector<16x16xf32>
    %17 = vector.broadcast %14 : f32 to vector<16x16xf32>
    %18 = arith.mulf %17, %16 : vector<16x16xf32>
    %19 = arith.addf %10, %18 : vector<16x16xf32>
    %c0_i32_15 = arith.constant 0 : i32
    %20 = arith.addi %9, %c0_i32_15 : i32
    %c1_i32_16 = arith.constant 1 : i32
    %21 = arith.addi %20, %c1_i32_16 : i32
    %22 = arith.index_cast %21 : i32 to index
    %23 = memref.load %arg2[%22] : memref<36xf32, #tpu.memory_space<smem>>
    %c0_17 = arith.constant 0 : index
    %c0_18 = arith.constant 0 : index
    %c1_19 = arith.constant 1 : index
    %24 = vector.load %arg5[%c0_17, %c0_18, %c1_19] : memref<4x18x18xf32, #tpu.memory_space<vmem>>, vector<1x16x16xf32>
    %25 = vector.shape_cast %24 : vector<1x16x16xf32> to vector<16x16xf32>
    %26 = vector.broadcast %23 : f32 to vector<16x16xf32>
    %27 = arith.mulf %26, %25 : vector<16x16xf32>
    %28 = arith.addf %19, %27 : vector<16x16xf32>
    %c0_i32_20 = arith.constant 0 : i32
    %29 = arith.addi %9, %c0_i32_20 : i32
    %c2_i32 = arith.constant 2 : i32
    %30 = arith.addi %29, %c2_i32 : i32
    %31 = arith.index_cast %30 : i32 to index
    %32 = memref.load %arg2[%31] : memref<36xf32, #tpu.memory_space<smem>>
    %c0_21 = arith.constant 0 : index
    %c0_22 = arith.constant 0 : index
    %c2 = arith.constant 2 : index
    %33 = vector.load %arg5[%c0_21, %c0_22, %c2] : memref<4x18x18xf32, #tpu.memory_space<vmem>>, vector<1x16x16xf32>
    %34 = vector.shape_cast %33 : vector<1x16x16xf32> to vector<16x16xf32>
    %35 = vector.broadcast %32 : f32 to vector<16x16xf32>
    %36 = arith.mulf %35, %34 : vector<16x16xf32>
    %37 = arith.addf %28, %36 : vector<16x16xf32>
    %c3_i32 = arith.constant 3 : i32
    %38 = arith.addi %9, %c3_i32 : i32
    %c0_i32_23 = arith.constant 0 : i32
    %39 = arith.addi %38, %c0_i32_23 : i32
    %40 = arith.index_cast %39 : i32 to index
    %41 = memref.load %arg2[%40] : memref<36xf32, #tpu.memory_space<smem>>
    %c0_24 = arith.constant 0 : index
    %c1_25 = arith.constant 1 : index
    %c0_26 = arith.constant 0 : index
    %42 = vector.load %arg5[%c0_24, %c1_25, %c0_26] : memref<4x18x18xf32, #tpu.memory_space<vmem>>, vector<1x16x16xf32>
    %43 = vector.shape_cast %42 : vector<1x16x16xf32> to vector<16x16xf32>
    %44 = vector.broadcast %41 : f32 to vector<16x16xf32>
    %45 = arith.mulf %44, %43 : vector<16x16xf32>
    %46 = arith.addf %37, %45 : vector<16x16xf32>
    %c3_i32_27 = arith.constant 3 : i32
    %47 = arith.addi %9, %c3_i32_27 : i32
    %c1_i32_28 = arith.constant 1 : i32
    %48 = arith.addi %47, %c1_i32_28 : i32
    %49 = arith.index_cast %48 : i32 to index
    %50 = memref.load %arg2[%49] : memref<36xf32, #tpu.memory_space<smem>>
    %c0_29 = arith.constant 0 : index
    %c1_30 = arith.constant 1 : index
    %c1_31 = arith.constant 1 : index
    %51 = vector.load %arg5[%c0_29, %c1_30, %c1_31] : memref<4x18x18xf32, #tpu.memory_space<vmem>>, vector<1x16x16xf32>
    %52 = vector.shape_cast %51 : vector<1x16x16xf32> to vector<16x16xf32>
    %53 = vector.broadcast %50 : f32 to vector<16x16xf32>
    %54 = arith.mulf %53, %52 : vector<16x16xf32>
    %55 = arith.addf %46, %54 : vector<16x16xf32>
    %c3_i32_32 = arith.constant 3 : i32
    %56 = arith.addi %9, %c3_i32_32 : i32
    %c2_i32_33 = arith.constant 2 : i32
    %57 = arith.addi %56, %c2_i32_33 : i32
    %58 = arith.index_cast %57 : i32 to index
    %59 = memref.load %arg2[%58] : memref<36xf32, #tpu.memory_space<smem>>
    %c0_34 = arith.constant 0 : index
    %c1_35 = arith.constant 1 : index
    %c2_36 = arith.constant 2 : index
    %60 = vector.load %arg5[%c0_34, %c1_35, %c2_36] : memref<4x18x18xf32, #tpu.memory_space<vmem>>, vector<1x16x16xf32>
    %61 = vector.shape_cast %60 : vector<1x16x16xf32> to vector<16x16xf32>
    %62 = vector.broadcast %59 : f32 to vector<16x16xf32>
    %63 = arith.mulf %62, %61 : vector<16x16xf32>
    %64 = arith.addf %55, %63 : vector<16x16xf32>
    %c6_i32 = arith.constant 6 : i32
    %65 = arith.addi %9, %c6_i32 : i32
    %c0_i32_37 = arith.constant 0 : i32
    %66 = arith.addi %65, %c0_i32_37 : i32
    %67 = arith.index_cast %66 : i32 to index
    %68 = memref.load %arg2[%67] : memref<36xf32, #tpu.memory_space<smem>>
    %c0_38 = arith.constant 0 : index
    %c2_39 = arith.constant 2 : index
    %c0_40 = arith.constant 0 : index
    %69 = vector.load %arg5[%c0_38, %c2_39, %c0_40] : memref<4x18x18xf32, #tpu.memory_space<vmem>>, vector<1x16x16xf32>
    %70 = vector.shape_cast %69 : vector<1x16x16xf32> to vector<16x16xf32>
    %71 = vector.broadcast %68 : f32 to vector<16x16xf32>
    %72 = arith.mulf %71, %70 : vector<16x16xf32>
    %73 = arith.addf %64, %72 : vector<16x16xf32>
    %c6_i32_41 = arith.constant 6 : i32
    %74 = arith.addi %9, %c6_i32_41 : i32
    %c1_i32_42 = arith.constant 1 : i32
    %75 = arith.addi %74, %c1_i32_42 : i32
    %76 = arith.index_cast %75 : i32 to index
    %77 = memref.load %arg2[%76] : memref<36xf32, #tpu.memory_space<smem>>
    %c0_43 = arith.constant 0 : index
    %c2_44 = arith.constant 2 : index
    %c1_45 = arith.constant 1 : index
    %78 = vector.load %arg5[%c0_43, %c2_44, %c1_45] : memref<4x18x18xf32, #tpu.memory_space<vmem>>, vector<1x16x16xf32>
    %79 = vector.shape_cast %78 : vector<1x16x16xf32> to vector<16x16xf32>
    %80 = vector.broadcast %77 : f32 to vector<16x16xf32>
    %81 = arith.mulf %80, %79 : vector<16x16xf32>
    %82 = arith.addf %73, %81 : vector<16x16xf32>
    %c6_i32_46 = arith.constant 6 : i32
    %83 = arith.addi %9, %c6_i32_46 : i32
    %c2_i32_47 = arith.constant 2 : i32
    %84 = arith.addi %83, %c2_i32_47 : i32
    %85 = arith.index_cast %84 : i32 to index
    %86 = memref.load %arg2[%85] : memref<36xf32, #tpu.memory_space<smem>>
    %c0_48 = arith.constant 0 : index
    %c2_49 = arith.constant 2 : index
    %c2_50 = arith.constant 2 : index
    %87 = vector.load %arg5[%c0_48, %c2_49, %c2_50] : memref<4x18x18xf32, #tpu.memory_space<vmem>>, vector<1x16x16xf32>
    %88 = vector.shape_cast %87 : vector<1x16x16xf32> to vector<16x16xf32>
    %89 = vector.broadcast %86 : f32 to vector<16x16xf32>
    %90 = arith.mulf %89, %88 : vector<16x16xf32>
    %91 = arith.addf %82, %90 : vector<16x16xf32>
    %cst_51 = arith.constant 0.000000e+00 : f32
    %92 = vector.broadcast %cst_51 : f32 to vector<16x16xf32>
    %93 = arith.cmpf ogt, %91, %92 : vector<16x16xf32>
    %cst_52 = arith.constant 2.000000e-01 : f32
    %94 = vector.broadcast %cst_52 : f32 to vector<16x16xf32>
    %95 = arith.mulf %94, %91 : vector<16x16xf32>
    %96 = arith.select %93, %91, %95 : vector<16x16xi1>, vector<16x16xf32>
    %c0_53 = arith.constant 0 : index
    %c0_54 = arith.constant 0 : index
    %c0_55 = arith.constant 0 : index
    %c0_56 = arith.constant 0 : index
    %97 = vector.load %arg4[%c0_53, %c0_54, %c0_55, %c0_56] : memref<1x4x16x16xf32, #tpu.memory_space<vmem>>, vector<1x1x16x16xf32>
    %98 = vector.shape_cast %97 : vector<1x1x16x16xf32> to vector<16x16xf32>
    %99 = vector.shape_cast %96 : vector<16x16xf32> to vector<1x1x16x16xf32>
    tpu.vector_store %arg4[%c0_53, %c0_54, %c0_55, %c0_56], %99 {strides = array<i32>} : memref<1x4x16x16xf32, #tpu.memory_space<vmem>>, vector<1x1x16x16xf32>,
    %c4_i32_57 = arith.constant 4 : i32
    %100 = arith.muli %arg1, %c4_i32_57 : i32
    %c1_i32_58 = arith.constant 1 : i32
    %101 = arith.addi %100, %c1_i32_58 : i32
    %c1_i32_59 = arith.constant 1 : i32
    %102 = arith.muli %101, %c1_i32_59 : i32
    %c0_i32_60 = arith.constant 0 : i32
    %103 = arith.addi %102, %c0_i32_60 : i32
    %c9_i32_61 = arith.constant 9 : i32
    %104 = arith.muli %103, %c9_i32_61 : i32
    %cst_62 = arith.constant 0.000000e+00 : f32
    %105 = vector.broadcast %cst_62 : f32 to vector<16x16xf32>
    %c0_i32_63 = arith.constant 0 : i32
    %106 = arith.addi %104, %c0_i32_63 : i32
    %c0_i32_64 = arith.constant 0 : i32
    %107 = arith.addi %106, %c0_i32_64 : i32
    %108 = arith.index_cast %107 : i32 to index
    %109 = memref.load %arg2[%108] : memref<36xf32, #tpu.memory_space<smem>>
    %c1_65 = arith.constant 1 : index
    %c0_66 = arith.constant 0 : index
    %c0_67 = arith.constant 0 : index
    %110 = vector.load %arg5[%c1_65, %c0_66, %c0_67] : memref<4x18x18xf32, #tpu.memory_space<vmem>>, vector<1x16x16xf32>
    %111 = vector.shape_cast %110 : vector<1x16x16xf32> to vector<16x16xf32>
    %112 = vector.broadcast %109 : f32 to vector<16x16xf32>
    %113 = arith.mulf %112, %111 : vector<16x16xf32>
    %114 = arith.addf %105, %113 : vector<16x16xf32>
    %c0_i32_68 = arith.constant 0 : i32
    %115 = arith.addi %104, %c0_i32_68 : i32
    %c1_i32_69 = arith.constant 1 : i32
    %116 = arith.addi %115, %c1_i32_69 : i32
    %117 = arith.index_cast %116 : i32 to index
    %118 = memref.load %arg2[%117] : memref<36xf32, #tpu.memory_space<smem>>
    %c1_70 = arith.constant 1 : index
    %c0_71 = arith.constant 0 : index
    %c1_72 = arith.constant 1 : index
    %119 = vector.load %arg5[%c1_70, %c0_71, %c1_72] : memref<4x18x18xf32, #tpu.memory_space<vmem>>, vector<1x16x16xf32>
    %120 = vector.shape_cast %119 : vector<1x16x16xf32> to vector<16x16xf32>
    %121 = vector.broadcast %118 : f32 to vector<16x16xf32>
    %122 = arith.mulf %121, %120 : vector<16x16xf32>
    %123 = arith.addf %114, %122 : vector<16x16xf32>
    %c0_i32_73 = arith.constant 0 : i32
    %124 = arith.addi %104, %c0_i32_73 : i32
    %c2_i32_74 = arith.constant 2 : i32
    %125 = arith.addi %124, %c2_i32_74 : i32
    %126 = arith.index_cast %125 : i32 to index
    %127 = memref.load %arg2[%126] : memref<36xf32, #tpu.memory_space<smem>>
    %c1_75 = arith.constant 1 : index
    %c0_76 = arith.constant 0 : index
    %c2_77 = arith.constant 2 : index
    %128 = vector.load %arg5[%c1_75, %c0_76, %c2_77] : memref<4x18x18xf32, #tpu.memory_space<vmem>>, vector<1x16x16xf32>
    %129 = vector.shape_cast %128 : vector<1x16x16xf32> to vector<16x16xf32>
    %130 = vector.broadcast %127 : f32 to vector<16x16xf32>
    %131 = arith.mulf %130, %129 : vector<16x16xf32>
    %132 = arith.addf %123, %131 : vector<16x16xf32>
    %c3_i32_78 = arith.constant 3 : i32
    %133 = arith.addi %104, %c3_i32_78 : i32
    %c0_i32_79 = arith.constant 0 : i32
    %134 = arith.addi %133, %c0_i32_79 : i32
    %135 = arith.index_cast %134 : i32 to index
    %136 = memref.load %arg2[%135] : memref<36xf32, #tpu.memory_space<smem>>
    %c1_80 = arith.constant 1 : index
    %c1_81 = arith.constant 1 : index
    %c0_82 = arith.constant 0 : index
    %137 = vector.load %arg5[%c1_80, %c1_81, %c0_82] : memref<4x18x18xf32, #tpu.memory_space<vmem>>, vector<1x16x16xf32>
    %138 = vector.shape_cast %137 : vector<1x16x16xf32> to vector<16x16xf32>
    %139 = vector.broadcast %136 : f32 to vector<16x16xf32>
    %140 = arith.mulf %139, %138 : vector<16x16xf32>
    %141 = arith.addf %132, %140 : vector<16x16xf32>
    %c3_i32_83 = arith.constant 3 : i32
    %142 = arith.addi %104, %c3_i32_83 : i32
    %c1_i32_84 = arith.constant 1 : i32
    %143 = arith.addi %142, %c1_i32_84 : i32
    %144 = arith.index_cast %143 : i32 to index
    %145 = memref.load %arg2[%144] : memref<36xf32, #tpu.memory_space<smem>>
    %c1_85 = arith.constant 1 : index
    %c1_86 = arith.constant 1 : index
    %c1_87 = arith.constant 1 : index
    %146 = vector.load %arg5[%c1_85, %c1_86, %c1_87] : memref<4x18x18xf32, #tpu.memory_space<vmem>>, vector<1x16x16xf32>
    %147 = vector.shape_cast %146 : vector<1x16x16xf32> to vector<16x16xf32>
    %148 = vector.broadcast %145 : f32 to vector<16x16xf32>
    %149 = arith.mulf %148, %147 : vector<16x16xf32>
    %150 = arith.addf %141, %149 : vector<16x16xf32>
    %c3_i32_88 = arith.constant 3 : i32
    %151 = arith.addi %104, %c3_i32_88 : i32
    %c2_i32_89 = arith.constant 2 : i32
    %152 = arith.addi %151, %c2_i32_89 : i32
    %153 = arith.index_cast %152 : i32 to index
    %154 = memref.load %arg2[%153] : memref<36xf32, #tpu.memory_space<smem>>
    %c1_90 = arith.constant 1 : index
    %c1_91 = arith.constant 1 : index
    %c2_92 = arith.constant 2 : index
    %155 = vector.load %arg5[%c1_90, %c1_91, %c2_92] : memref<4x18x18xf32, #tpu.memory_space<vmem>>, vector<1x16x16xf32>
    %156 = vector.shape_cast %155 : vector<1x16x16xf32> to vector<16x16xf32>
    %157 = vector.broadcast %154 : f32 to vector<16x16xf32>
    %158 = arith.mulf %157, %156 : vector<16x16xf32>
    %159 = arith.addf %150, %158 : vector<16x16xf32>
    %c6_i32_93 = arith.constant 6 : i32
    %160 = arith.addi %104, %c6_i32_93 : i32
    %c0_i32_94 = arith.constant 0 : i32
    %161 = arith.addi %160, %c0_i32_94 : i32
    %162 = arith.index_cast %161 : i32 to index
    %163 = memref.load %arg2[%162] : memref<36xf32, #tpu.memory_space<smem>>
    %c1_95 = arith.constant 1 : index
    %c2_96 = arith.constant 2 : index
    %c0_97 = arith.constant 0 : index
    %164 = vector.load %arg5[%c1_95, %c2_96, %c0_97] : memref<4x18x18xf32, #tpu.memory_space<vmem>>, vector<1x16x16xf32>
    %165 = vector.shape_cast %164 : vector<1x16x16xf32> to vector<16x16xf32>
    %166 = vector.broadcast %163 : f32 to vector<16x16xf32>
    %167 = arith.mulf %166, %165 : vector<16x16xf32>
    %168 = arith.addf %159, %167 : vector<16x16xf32>
    %c6_i32_98 = arith.constant 6 : i32
    %169 = arith.addi %104, %c6_i32_98 : i32
    %c1_i32_99 = arith.constant 1 : i32
    %170 = arith.addi %169, %c1_i32_99 : i32
    %171 = arith.index_cast %170 : i32 to index
    %172 = memref.load %arg2[%171] : memref<36xf32, #tpu.memory_space<smem>>
    %c1_100 = arith.constant 1 : index
    %c2_101 = arith.constant 2 : index
    %c1_102 = arith.constant 1 : index
    %173 = vector.load %arg5[%c1_100, %c2_101, %c1_102] : memref<4x18x18xf32, #tpu.memory_space<vmem>>, vector<1x16x16xf32>
    %174 = vector.shape_cast %173 : vector<1x16x16xf32> to vector<16x16xf32>
    %175 = vector.broadcast %172 : f32 to vector<16x16xf32>
    %176 = arith.mulf %175, %174 : vector<16x16xf32>
    %177 = arith.addf %168, %176 : vector<16x16xf32>
    %c6_i32_103 = arith.constant 6 : i32
    %178 = arith.addi %104, %c6_i32_103 : i32
    %c2_i32_104 = arith.constant 2 : i32
    %179 = arith.addi %178, %c2_i32_104 : i32
    %180 = arith.index_cast %179 : i32 to index
    %181 = memref.load %arg2[%180] : memref<36xf32, #tpu.memory_space<smem>>
    %c1_105 = arith.constant 1 : index
    %c2_106 = arith.constant 2 : index
    %c2_107 = arith.constant 2 : index
    %182 = vector.load %arg5[%c1_105, %c2_106, %c2_107] : memref<4x18x18xf32, #tpu.memory_space<vmem>>, vector<1x16x16xf32>
    %183 = vector.shape_cast %182 : vector<1x16x16xf32> to vector<16x16xf32>
    %184 = vector.broadcast %181 : f32 to vector<16x16xf32>
    %185 = arith.mulf %184, %183 : vector<16x16xf32>
    %186 = arith.addf %177, %185 : vector<16x16xf32>
    %cst_108 = arith.constant 0.000000e+00 : f32
    %187 = vector.broadcast %cst_108 : f32 to vector<16x16xf32>
    %188 = arith.cmpf ogt, %186, %187 : vector<16x16xf32>
    %cst_109 = arith.constant 2.000000e-01 : f32
    %189 = vector.broadcast %cst_109 : f32 to vector<16x16xf32>
    %190 = arith.mulf %189, %186 : vector<16x16xf32>
    %191 = arith.select %188, %186, %190 : vector<16x16xi1>, vector<16x16xf32>
    %c0_110 = arith.constant 0 : index
    %c1_111 = arith.constant 1 : index
    %c0_112 = arith.constant 0 : index
    %c0_113 = arith.constant 0 : index
    %192 = vector.load %arg4[%c0_110, %c1_111, %c0_112, %c0_113] : memref<1x4x16x16xf32, #tpu.memory_space<vmem>>, vector<1x1x16x16xf32>
    %193 = vector.shape_cast %192 : vector<1x1x16x16xf32> to vector<16x16xf32>
    %194 = vector.shape_cast %191 : vector<16x16xf32> to vector<1x1x16x16xf32>
    tpu.vector_store %arg4[%c0_110, %c1_111, %c0_112, %c0_113], %194 {strides = array<i32>} : memref<1x4x16x16xf32, #tpu.memory_space<vmem>>, vector<1x1x16x16xf32>,
    %c4_i32_114 = arith.constant 4 : i32
    %195 = arith.muli %arg1, %c4_i32_114 : i32
    %c2_i32_115 = arith.constant 2 : i32
    %196 = arith.addi %195, %c2_i32_115 : i32
    %c1_i32_116 = arith.constant 1 : i32
    %197 = arith.muli %196, %c1_i32_116 : i32
    %c0_i32_117 = arith.constant 0 : i32
    %198 = arith.addi %197, %c0_i32_117 : i32
    %c9_i32_118 = arith.constant 9 : i32
    %199 = arith.muli %198, %c9_i32_118 : i32
    %cst_119 = arith.constant 0.000000e+00 : f32
    %200 = vector.broadcast %cst_119 : f32 to vector<16x16xf32>
    %c0_i32_120 = arith.constant 0 : i32
    %201 = arith.addi %199, %c0_i32_120 : i32
    %c0_i32_121 = arith.constant 0 : i32
    %202 = arith.addi %201, %c0_i32_121 : i32
    %203 = arith.index_cast %202 : i32 to index
    %204 = memref.load %arg2[%203] : memref<36xf32, #tpu.memory_space<smem>>
    %c2_122 = arith.constant 2 : index
    %c0_123 = arith.constant 0 : index
    %c0_124 = arith.constant 0 : index
    %205 = vector.load %arg5[%c2_122, %c0_123, %c0_124] : memref<4x18x18xf32, #tpu.memory_space<vmem>>, vector<1x16x16xf32>
    %206 = vector.shape_cast %205 : vector<1x16x16xf32> to vector<16x16xf32>
    %207 = vector.broadcast %204 : f32 to vector<16x16xf32>
    %208 = arith.mulf %207, %206 : vector<16x16xf32>
    %209 = arith.addf %200, %208 : vector<16x16xf32>
    %c0_i32_125 = arith.constant 0 : i32
    %210 = arith.addi %199, %c0_i32_125 : i32
    %c1_i32_126 = arith.constant 1 : i32
    %211 = arith.addi %210, %c1_i32_126 : i32
    %212 = arith.index_cast %211 : i32 to index
    %213 = memref.load %arg2[%212] : memref<36xf32, #tpu.memory_space<smem>>
    %c2_127 = arith.constant 2 : index
    %c0_128 = arith.constant 0 : index
    %c1_129 = arith.constant 1 : index
    %214 = vector.load %arg5[%c2_127, %c0_128, %c1_129] : memref<4x18x18xf32, #tpu.memory_space<vmem>>, vector<1x16x16xf32>
    %215 = vector.shape_cast %214 : vector<1x16x16xf32> to vector<16x16xf32>
    %216 = vector.broadcast %213 : f32 to vector<16x16xf32>
    %217 = arith.mulf %216, %215 : vector<16x16xf32>
    %218 = arith.addf %209, %217 : vector<16x16xf32>
    %c0_i32_130 = arith.constant 0 : i32
    %219 = arith.addi %199, %c0_i32_130 : i32
    %c2_i32_131 = arith.constant 2 : i32
    %220 = arith.addi %219, %c2_i32_131 : i32
    %221 = arith.index_cast %220 : i32 to index
    %222 = memref.load %arg2[%221] : memref<36xf32, #tpu.memory_space<smem>>
    %c2_132 = arith.constant 2 : index
    %c0_133 = arith.constant 0 : index
    %c2_134 = arith.constant 2 : index
    %223 = vector.load %arg5[%c2_132, %c0_133, %c2_134] : memref<4x18x18xf32, #tpu.memory_space<vmem>>, vector<1x16x16xf32>
    %224 = vector.shape_cast %223 : vector<1x16x16xf32> to vector<16x16xf32>
    %225 = vector.broadcast %222 : f32 to vector<16x16xf32>
    %226 = arith.mulf %225, %224 : vector<16x16xf32>
    %227 = arith.addf %218, %226 : vector<16x16xf32>
    %c3_i32_135 = arith.constant 3 : i32
    %228 = arith.addi %199, %c3_i32_135 : i32
    %c0_i32_136 = arith.constant 0 : i32
    %229 = arith.addi %228, %c0_i32_136 : i32
    %230 = arith.index_cast %229 : i32 to index
    %231 = memref.load %arg2[%230] : memref<36xf32, #tpu.memory_space<smem>>
    %c2_137 = arith.constant 2 : index
    %c1_138 = arith.constant 1 : index
    %c0_139 = arith.constant 0 : index
    %232 = vector.load %arg5[%c2_137, %c1_138, %c0_139] : memref<4x18x18xf32, #tpu.memory_space<vmem>>, vector<1x16x16xf32>
    %233 = vector.shape_cast %232 : vector<1x16x16xf32> to vector<16x16xf32>
    %234 = vector.broadcast %231 : f32 to vector<16x16xf32>
    %235 = arith.mulf %234, %233 : vector<16x16xf32>
    %236 = arith.addf %227, %235 : vector<16x16xf32>
    %c3_i32_140 = arith.constant 3 : i32
    %237 = arith.addi %199, %c3_i32_140 : i32
    %c1_i32_141 = arith.constant 1 : i32
    %238 = arith.addi %237, %c1_i32_141 : i32
    %239 = arith.index_cast %238 : i32 to index
    %240 = memref.load %arg2[%239] : memref<36xf32, #tpu.memory_space<smem>>
    %c2_142 = arith.constant 2 : index
    %c1_143 = arith.constant 1 : index
    %c1_144 = arith.constant 1 : index
    %241 = vector.load %arg5[%c2_142, %c1_143, %c1_144] : memref<4x18x18xf32, #tpu.memory_space<vmem>>, vector<1x16x16xf32>
    %242 = vector.shape_cast %241 : vector<1x16x16xf32> to vector<16x16xf32>
    %243 = vector.broadcast %240 : f32 to vector<16x16xf32>
    %244 = arith.mulf %243, %242 : vector<16x16xf32>
    %245 = arith.addf %236, %244 : vector<16x16xf32>
    %c3_i32_145 = arith.constant 3 : i32
    %246 = arith.addi %199, %c3_i32_145 : i32
    %c2_i32_146 = arith.constant 2 : i32
    %247 = arith.addi %246, %c2_i32_146 : i32
    %248 = arith.index_cast %247 : i32 to index
    %249 = memref.load %arg2[%248] : memref<36xf32, #tpu.memory_space<smem>>
    %c2_147 = arith.constant 2 : index
    %c1_148 = arith.constant 1 : index
    %c2_149 = arith.constant 2 : index
    %250 = vector.load %arg5[%c2_147, %c1_148, %c2_149] : memref<4x18x18xf32, #tpu.memory_space<vmem>>, vector<1x16x16xf32>
    %251 = vector.shape_cast %250 : vector<1x16x16xf32> to vector<16x16xf32>
    %252 = vector.broadcast %249 : f32 to vector<16x16xf32>
    %253 = arith.mulf %252, %251 : vector<16x16xf32>
    %254 = arith.addf %245, %253 : vector<16x16xf32>
    %c6_i32_150 = arith.constant 6 : i32
    %255 = arith.addi %199, %c6_i32_150 : i32
    %c0_i32_151 = arith.constant 0 : i32
    %256 = arith.addi %255, %c0_i32_151 : i32
    %257 = arith.index_cast %256 : i32 to index
    %258 = memref.load %arg2[%257] : memref<36xf32, #tpu.memory_space<smem>>
    %c2_152 = arith.constant 2 : index
    %c2_153 = arith.constant 2 : index
    %c0_154 = arith.constant 0 : index
    %259 = vector.load %arg5[%c2_152, %c2_153, %c0_154] : memref<4x18x18xf32, #tpu.memory_space<vmem>>, vector<1x16x16xf32>
    %260 = vector.shape_cast %259 : vector<1x16x16xf32> to vector<16x16xf32>
    %261 = vector.broadcast %258 : f32 to vector<16x16xf32>
    %262 = arith.mulf %261, %260 : vector<16x16xf32>
    %263 = arith.addf %254, %262 : vector<16x16xf32>
    %c6_i32_155 = arith.constant 6 : i32
    %264 = arith.addi %199, %c6_i32_155 : i32
    %c1_i32_156 = arith.constant 1 : i32
    %265 = arith.addi %264, %c1_i32_156 : i32
    %266 = arith.index_cast %265 : i32 to index
    %267 = memref.load %arg2[%266] : memref<36xf32, #tpu.memory_space<smem>>
    %c2_157 = arith.constant 2 : index
    %c2_158 = arith.constant 2 : index
    %c1_159 = arith.constant 1 : index
    %268 = vector.load %arg5[%c2_157, %c2_158, %c1_159] : memref<4x18x18xf32, #tpu.memory_space<vmem>>, vector<1x16x16xf32>
    %269 = vector.shape_cast %268 : vector<1x16x16xf32> to vector<16x16xf32>
    %270 = vector.broadcast %267 : f32 to vector<16x16xf32>
    %271 = arith.mulf %270, %269 : vector<16x16xf32>
    %272 = arith.addf %263, %271 : vector<16x16xf32>
    %c6_i32_160 = arith.constant 6 : i32
    %273 = arith.addi %199, %c6_i32_160 : i32
    %c2_i32_161 = arith.constant 2 : i32
    %274 = arith.addi %273, %c2_i32_161 : i32
    %275 = arith.index_cast %274 : i32 to index
    %276 = memref.load %arg2[%275] : memref<36xf32, #tpu.memory_space<smem>>
    %c2_162 = arith.constant 2 : index
    %c2_163 = arith.constant 2 : index
    %c2_164 = arith.constant 2 : index
    %277 = vector.load %arg5[%c2_162, %c2_163, %c2_164] : memref<4x18x18xf32, #tpu.memory_space<vmem>>, vector<1x16x16xf32>
    %278 = vector.shape_cast %277 : vector<1x16x16xf32> to vector<16x16xf32>
    %279 = vector.broadcast %276 : f32 to vector<16x16xf32>
    %280 = arith.mulf %279, %278 : vector<16x16xf32>
    %281 = arith.addf %272, %280 : vector<16x16xf32>
    %cst_165 = arith.constant 0.000000e+00 : f32
    %282 = vector.broadcast %cst_165 : f32 to vector<16x16xf32>
    %283 = arith.cmpf ogt, %281, %282 : vector<16x16xf32>
    %cst_166 = arith.constant 2.000000e-01 : f32
    %284 = vector.broadcast %cst_166 : f32 to vector<16x16xf32>
    %285 = arith.mulf %284, %281 : vector<16x16xf32>
    %286 = arith.select %283, %281, %285 : vector<16x16xi1>, vector<16x16xf32>
    %c0_167 = arith.constant 0 : index
    %c2_168 = arith.constant 2 : index
    %c0_169 = arith.constant 0 : index
    %c0_170 = arith.constant 0 : index
    %287 = vector.load %arg4[%c0_167, %c2_168, %c0_169, %c0_170] : memref<1x4x16x16xf32, #tpu.memory_space<vmem>>, vector<1x1x16x16xf32>
    %288 = vector.shape_cast %287 : vector<1x1x16x16xf32> to vector<16x16xf32>
    %289 = vector.shape_cast %286 : vector<16x16xf32> to vector<1x1x16x16xf32>
    tpu.vector_store %arg4[%c0_167, %c2_168, %c0_169, %c0_170], %289 {strides = array<i32>} : memref<1x4x16x16xf32, #tpu.memory_space<vmem>>, vector<1x1x16x16xf32>,
    %c4_i32_171 = arith.constant 4 : i32
    %290 = arith.muli %arg1, %c4_i32_171 : i32
    %c3_i32_172 = arith.constant 3 : i32
    %291 = arith.addi %290, %c3_i32_172 : i32
    %c1_i32_173 = arith.constant 1 : i32
    %292 = arith.muli %291, %c1_i32_173 : i32
    %c0_i32_174 = arith.constant 0 : i32
    %293 = arith.addi %292, %c0_i32_174 : i32
    %c9_i32_175 = arith.constant 9 : i32
    %294 = arith.muli %293, %c9_i32_175 : i32
    %cst_176 = arith.constant 0.000000e+00 : f32
    %295 = vector.broadcast %cst_176 : f32 to vector<16x16xf32>
    %c0_i32_177 = arith.constant 0 : i32
    %296 = arith.addi %294, %c0_i32_177 : i32
    %c0_i32_178 = arith.constant 0 : i32
    %297 = arith.addi %296, %c0_i32_178 : i32
    %298 = arith.index_cast %297 : i32 to index
    %299 = memref.load %arg2[%298] : memref<36xf32, #tpu.memory_space<smem>>
    %c3 = arith.constant 3 : index
    %c0_179 = arith.constant 0 : index
    %c0_180 = arith.constant 0 : index
    %300 = vector.load %arg5[%c3, %c0_179, %c0_180] : memref<4x18x18xf32, #tpu.memory_space<vmem>>, vector<1x16x16xf32>
    %301 = vector.shape_cast %300 : vector<1x16x16xf32> to vector<16x16xf32>
    %302 = vector.broadcast %299 : f32 to vector<16x16xf32>
    %303 = arith.mulf %302, %301 : vector<16x16xf32>
    %304 = arith.addf %295, %303 : vector<16x16xf32>
    %c0_i32_181 = arith.constant 0 : i32
    %305 = arith.addi %294, %c0_i32_181 : i32
    %c1_i32_182 = arith.constant 1 : i32
    %306 = arith.addi %305, %c1_i32_182 : i32
    %307 = arith.index_cast %306 : i32 to index
    %308 = memref.load %arg2[%307] : memref<36xf32, #tpu.memory_space<smem>>
    %c3_183 = arith.constant 3 : index
    %c0_184 = arith.constant 0 : index
    %c1_185 = arith.constant 1 : index
    %309 = vector.load %arg5[%c3_183, %c0_184, %c1_185] : memref<4x18x18xf32, #tpu.memory_space<vmem>>, vector<1x16x16xf32>
    %310 = vector.shape_cast %309 : vector<1x16x16xf32> to vector<16x16xf32>
    %311 = vector.broadcast %308 : f32 to vector<16x16xf32>
    %312 = arith.mulf %311, %310 : vector<16x16xf32>
    %313 = arith.addf %304, %312 : vector<16x16xf32>
    %c0_i32_186 = arith.constant 0 : i32
    %314 = arith.addi %294, %c0_i32_186 : i32
    %c2_i32_187 = arith.constant 2 : i32
    %315 = arith.addi %314, %c2_i32_187 : i32
    %316 = arith.index_cast %315 : i32 to index
    %317 = memref.load %arg2[%316] : memref<36xf32, #tpu.memory_space<smem>>
    %c3_188 = arith.constant 3 : index
    %c0_189 = arith.constant 0 : index
    %c2_190 = arith.constant 2 : index
    %318 = vector.load %arg5[%c3_188, %c0_189, %c2_190] : memref<4x18x18xf32, #tpu.memory_space<vmem>>, vector<1x16x16xf32>
    %319 = vector.shape_cast %318 : vector<1x16x16xf32> to vector<16x16xf32>
    %320 = vector.broadcast %317 : f32 to vector<16x16xf32>
    %321 = arith.mulf %320, %319 : vector<16x16xf32>
    %322 = arith.addf %313, %321 : vector<16x16xf32>
    %c3_i32_191 = arith.constant 3 : i32
    %323 = arith.addi %294, %c3_i32_191 : i32
    %c0_i32_192 = arith.constant 0 : i32
    %324 = arith.addi %323, %c0_i32_192 : i32
    %325 = arith.index_cast %324 : i32 to index
    %326 = memref.load %arg2[%325] : memref<36xf32, #tpu.memory_space<smem>>
    %c3_193 = arith.constant 3 : index
    %c1_194 = arith.constant 1 : index
    %c0_195 = arith.constant 0 : index
    %327 = vector.load %arg5[%c3_193, %c1_194, %c0_195] : memref<4x18x18xf32, #tpu.memory_space<vmem>>, vector<1x16x16xf32>
    %328 = vector.shape_cast %327 : vector<1x16x16xf32> to vector<16x16xf32>
    %329 = vector.broadcast %326 : f32 to vector<16x16xf32>
    %330 = arith.mulf %329, %328 : vector<16x16xf32>
    %331 = arith.addf %322, %330 : vector<16x16xf32>
    %c3_i32_196 = arith.constant 3 : i32
    %332 = arith.addi %294, %c3_i32_196 : i32
    %c1_i32_197 = arith.constant 1 : i32
    %333 = arith.addi %332, %c1_i32_197 : i32
    %334 = arith.index_cast %333 : i32 to index
    %335 = memref.load %arg2[%334] : memref<36xf32, #tpu.memory_space<smem>>
    %c3_198 = arith.constant 3 : index
    %c1_199 = arith.constant 1 : index
    %c1_200 = arith.constant 1 : index
    %336 = vector.load %arg5[%c3_198, %c1_199, %c1_200] : memref<4x18x18xf32, #tpu.memory_space<vmem>>, vector<1x16x16xf32>
    %337 = vector.shape_cast %336 : vector<1x16x16xf32> to vector<16x16xf32>
    %338 = vector.broadcast %335 : f32 to vector<16x16xf32>
    %339 = arith.mulf %338, %337 : vector<16x16xf32>
    %340 = arith.addf %331, %339 : vector<16x16xf32>
    %c3_i32_201 = arith.constant 3 : i32
    %341 = arith.addi %294, %c3_i32_201 : i32
    %c2_i32_202 = arith.constant 2 : i32
    %342 = arith.addi %341, %c2_i32_202 : i32
    %343 = arith.index_cast %342 : i32 to index
    %344 = memref.load %arg2[%343] : memref<36xf32, #tpu.memory_space<smem>>
    %c3_203 = arith.constant 3 : index
    %c1_204 = arith.constant 1 : index
    %c2_205 = arith.constant 2 : index
    %345 = vector.load %arg5[%c3_203, %c1_204, %c2_205] : memref<4x18x18xf32, #tpu.memory_space<vmem>>, vector<1x16x16xf32>
    %346 = vector.shape_cast %345 : vector<1x16x16xf32> to vector<16x16xf32>
    %347 = vector.broadcast %344 : f32 to vector<16x16xf32>
    %348 = arith.mulf %347, %346 : vector<16x16xf32>
    %349 = arith.addf %340, %348 : vector<16x16xf32>
    %c6_i32_206 = arith.constant 6 : i32
    %350 = arith.addi %294, %c6_i32_206 : i32
    %c0_i32_207 = arith.constant 0 : i32
    %351 = arith.addi %350, %c0_i32_207 : i32
    %352 = arith.index_cast %351 : i32 to index
    %353 = memref.load %arg2[%352] : memref<36xf32, #tpu.memory_space<smem>>
    %c3_208 = arith.constant 3 : index
    %c2_209 = arith.constant 2 : index
    %c0_210 = arith.constant 0 : index
    %354 = vector.load %arg5[%c3_208, %c2_209, %c0_210] : memref<4x18x18xf32, #tpu.memory_space<vmem>>, vector<1x16x16xf32>
    %355 = vector.shape_cast %354 : vector<1x16x16xf32> to vector<16x16xf32>
    %356 = vector.broadcast %353 : f32 to vector<16x16xf32>
    %357 = arith.mulf %356, %355 : vector<16x16xf32>
    %358 = arith.addf %349, %357 : vector<16x16xf32>
    %c6_i32_211 = arith.constant 6 : i32
    %359 = arith.addi %294, %c6_i32_211 : i32
    %c1_i32_212 = arith.constant 1 : i32
    %360 = arith.addi %359, %c1_i32_212 : i32
    %361 = arith.index_cast %360 : i32 to index
    %362 = memref.load %arg2[%361] : memref<36xf32, #tpu.memory_space<smem>>
    %c3_213 = arith.constant 3 : index
    %c2_214 = arith.constant 2 : index
    %c1_215 = arith.constant 1 : index
    %363 = vector.load %arg5[%c3_213, %c2_214, %c1_215] : memref<4x18x18xf32, #tpu.memory_space<vmem>>, vector<1x16x16xf32>
    %364 = vector.shape_cast %363 : vector<1x16x16xf32> to vector<16x16xf32>
    %365 = vector.broadcast %362 : f32 to vector<16x16xf32>
    %366 = arith.mulf %365, %364 : vector<16x16xf32>
    %367 = arith.addf %358, %366 : vector<16x16xf32>
    %c6_i32_216 = arith.constant 6 : i32
    %368 = arith.addi %294, %c6_i32_216 : i32
    %c2_i32_217 = arith.constant 2 : i32
    %369 = arith.addi %368, %c2_i32_217 : i32
    %370 = arith.index_cast %369 : i32 to index
    %371 = memref.load %arg2[%370] : memref<36xf32, #tpu.memory_space<smem>>
    %c3_218 = arith.constant 3 : index
    %c2_219 = arith.constant 2 : index
    %c2_220 = arith.constant 2 : index
    %372 = vector.load %arg5[%c3_218, %c2_219, %c2_220] : memref<4x18x18xf32, #tpu.memory_space<vmem>>, vector<1x16x16xf32>
    %373 = vector.shape_cast %372 : vector<1x16x16xf32> to vector<16x16xf32>
    %374 = vector.broadcast %371 : f32 to vector<16x16xf32>
    %375 = arith.mulf %374, %373 : vector<16x16xf32>
    %376 = arith.addf %367, %375 : vector<16x16xf32>
    %cst_221 = arith.constant 0.000000e+00 : f32
    %377 = vector.broadcast %cst_221 : f32 to vector<16x16xf32>
    %378 = arith.cmpf ogt, %376, %377 : vector<16x16xf32>
    %cst_222 = arith.constant 2.000000e-01 : f32
    %379 = vector.broadcast %cst_222 : f32 to vector<16x16xf32>
    %380 = arith.mulf %379, %376 : vector<16x16xf32>
    %381 = arith.select %378, %376, %380 : vector<16x16xi1>, vector<16x16xf32>
    %c0_223 = arith.constant 0 : index
    %c3_224 = arith.constant 3 : index
    %c0_225 = arith.constant 0 : index
    %c0_226 = arith.constant 0 : index
    %382 = vector.load %arg4[%c0_223, %c3_224, %c0_225, %c0_226] : memref<1x4x16x16xf32, #tpu.memory_space<vmem>>, vector<1x1x16x16xf32>
    %383 = vector.shape_cast %382 : vector<1x1x16x16xf32> to vector<16x16xf32>
    %384 = vector.shape_cast %381 : vector<16x16xf32> to vector<1x1x16x16xf32>
    tpu.vector_store %arg4[%c0_223, %c3_224, %c0_225, %c0_226], %384 {strides = array<i32>} : memref<1x4x16x16xf32, #tpu.memory_space<vmem>>, vector<1x1x16x16xf32>,
    return
  }
  func.func @transform_0(%arg0: i32, %arg1: i32) -> i32 {
    %c0_i32 = arith.constant 0 : i32
    %c0_i32_0 = arith.constant 0 : i32
    return %c0_i32 : i32
  }
  func.func @transform_1(%arg0: i32, %arg1: i32) -> (i32, i32, i32, i32) {
    %c0_i32 = arith.constant 0 : i32
    %c0_i32_0 = arith.constant 0 : i32
    %c0_i32_1 = arith.constant 0 : i32
    return %arg0, %arg1, %c0_i32, %c0_i32_0 : i32, i32, i32, i32
  }
  func.func @transform_2(%arg0: i32, %arg1: i32) -> (i32, i32, i32, i32) {
    %c0_i32 = arith.constant 0 : i32
    %c0_i32_0 = arith.constant 0 : i32
    %c0_i32_1 = arith.constant 0 : i32
    return %arg0, %arg1, %c0_i32, %c0_i32_0 : i32, i32, i32, i32
  }
}

</mosaic_0001>

<llo_original>
// kernel: tpu_custom_call.1
$region0: #{tpu_custom_call.1}
  #allocation0 [shape = 'u32[]', space=smem, size = 0x4, offset = 0x4, fixed_abs, tag = 'smem constant byte address 0x4 - core index']
  #allocation1 [shape = 'u32[144,128]{1,0:T(1,128)}', space=vmem, size = 0x12000, scoped, tag = 'internal scratch']
  #allocation2 [shape = 'f32[4,18,18]{2,1,0:T(8,128)}', space=vmem, size = 0xc000, scoped, tag = 'scratch operand']
  %s0 = inlined_call_operand.hbm [shape: f32[36], index: 0, kind: input, shape index: {}]
  %s1 = inlined_call_operand.hbm [shape: f32[2,4,16,16], index: 1, kind: input, shape index: {}]
  %s2 = inlined_call_operand.hbm [shape: f32[2,4,16,16], index: 2, kind: output, shape index: {}]
  %s3 = sld [smem:[#allocation0]]
  $region49: #{tpu_custom_call.1} parent=0
    _
  %s5 = ssub.s32 1, %s3
  %s6 = scalar_select 0, %s5, %s3
  $region1: #{tpu_custom_call.1} parent=0
    #allocation3 [shape = 'u8[512]{0}', space=smem, size = 0x200, scoped, tag = 'input window, operand 0, single buffered']
    #allocation4 [shape = 's32[2]{0}', space=sflag, size = 0x8, scoped, tag = 'scoped memory for tpu_custom_call.1']
    #allocation5 [shape = 's32[2]{0}', space=sflag, size = 0x8, scoped, tag = 'scoped memory for tpu_custom_call.1']
    #allocation6 [shape = 's32[2]{0}', space=sflag, size = 0x8, scoped, tag = 'scoped memory for tpu_custom_call.1']
    #allocation7 [shape = 'u8[65536]{0}', space=vmem, size = 0x10000, scoped, tag = 'input window, operand 1']
    #allocation8 [shape = 'u8[65536]{0}', space=vmem, size = 0x10000, scoped, tag = 'output window, operand 0']
    %7 = vsyncpa [#allocation6], 0
    %8 = vsyncpa [#allocation4], 0
    %s9 = scalar_lea.sflag [#allocation4], 1
    %10 = vsyncpa %s9, 0
    %11 = vsyncpa [#allocation5], 0
    %s12 = scalar_lea.sflag [#allocation5], 1
    %13 = vsyncpa %s12, 0
    loop: start=0, step=1, limit=4
    $region2: #{tpu_custom_call.1} parent=1 // loop_pre_header
      _
    $region3: #{tpu_custom_call.1} parent=1 // loop_header
      %s15 = sphi 0, %s19
      %p16 = scmp.ge.s32.totalorder %s15, 4
      %s22 = sphi 0, %s34
      %s23 = sphi 0, %s30
      %s24 = sphi 0, %s22
      %s25 = sphi 0, %s23
      %s26 = sphi 0, %s24
      %s27 = sphi 0, %s25
      %s35 = sphi 0, %s35
      %s37 = sphi 0, %s35
      %s38 = sphi 0, %s37
      %s52 = sphi 0, %s38
      %s60 = sphi 0, %s62
      %s63 = sphi 0, %s60
      %s64 = sphi 0, %s63
      %s80 = sphi 0, %s64
      %s88 = sphi 0, %s90
      %s91 = sphi 0, %s88
      %s92 = sphi 0, %s91
      %s108 = sphi 0, %s92
    $region4: #{tpu_custom_call.1} parent=1 // loop_header_branch
      %18 = sbr.rel (%p16) target = $region8
    $region5: #{tpu_custom_call.1} parent=1 // loop_body
      %s20 = ssub.s32 %s15, 1
      %s21 = ssub.s32 %s15, 2
      %s28 = sadd.s32 1, %s23
      %p29 = scmp.ge.s32.totalorder %s28, 1
      %s30 = scalar_select %p29, 0, %s28
      %s31 = sadd.s32 1, %s22
      %s32 = scalar_select %p29, %s31, %s22
      %p33 = scmp.ge.s32.totalorder %s32, 2
      %s34 = scalar_select %p33, 0, %s32
      %s36 = sadd.s32 %s35, 1
      %p39 = scmp.eq.s32.totalorder %s15, 1
      %p40 = scmp.ne.s32.totalorder %s35, %s37
      %p41 = scmp.eq.s32.totalorder %s15, 0
      %p42 = por %p40, %p41
      %p43 = scmp.ne.s32.totalorder %s35, %s37
      %p44 = scmp.eq.s32.totalorder %s20, 1
      %p45 = por %p43, %p44
      %p46 = scmp.ne.s32.totalorder %s37, %s38
      %p47 = scmp.eq.s32.totalorder %s20, 0
      %p48 = por %p46, %p47
      %p49 = scmp.ne.s32.totalorder %s37, %s38
      %p50 = scmp.eq.s32.totalorder %s21, 1
      %p51 = por %p49, %p50
      %p53 = scmp.ne.s32.totalorder %s38, %s52
      %p54 = scmp.eq.s32.totalorder %s21, 0
      %p55 = por %p53, %p54
      %s56 = ssub.s32 %s22, %s34
      %s57 = ssub.s32 %s23, %s30
      %s58 = sor.u32 %s56, %s57
      %p59 = scmp.eq.s32.totalorder %s58, 0
      %s61 = sadd.s32 %s60, 1
      %s62 = scalar_select %p59, %s60, %s61
      %p65 = pneg %p59
      %p66 = scmp.eq.s32.totalorder %s15, 1
      %p67 = por %p65, %p66
      %p68 = scmp.ne.s32.totalorder %s60, %s63
      %p69 = scmp.eq.s32.totalorder %s15, 0
      %p70 = por %p68, %p69
      %p71 = scmp.ne.s32.totalorder %s60, %s63
      %p72 = scmp.eq.s32.totalorder %s20, 1
      %p73 = por %p71, %p72
      %p74 = scmp.ne.s32.totalorder %s63, %s64
      %p75 = scmp.eq.s32.totalorder %s20, 0
      %p76 = por %p74, %p75
      %p77 = scmp.ne.s32.totalorder %s63, %s64
      %p78 = scmp.eq.s32.totalorder %s21, 1
      %p79 = por %p77, %p78
      %p81 = scmp.ne.s32.totalorder %s64, %s80
      %p82 = scmp.eq.s32.totalorder %s21, 0
      %p83 = por %p81, %p82
      %s84 = ssub.s32 %s22, %s34
      %s85 = ssub.s32 %s23, %s30
      %s86 = sor.u32 %s84, %s85
      %p87 = scmp.eq.s32.totalorder %s86, 0
      %s89 = sadd.s32 %s88, 1
      %s90 = scalar_select %p87, %s88, %s89
      %p93 = pneg %p87
      %p94 = scmp.eq.s32.totalorder %s15, 1
      %p95 = por %p93, %p94
      %p96 = scmp.ne.s32.totalorder %s88, %s91
      %p97 = scmp.eq.s32.totalorder %s15, 0
      %p98 = por %p96, %p97
      %p99 = scmp.ne.s32.totalorder %s88, %s91
      %p100 = scmp.eq.s32.totalorder %s20, 1
      %p101 = por %p99, %p100
      %p102 = scmp.ne.s32.totalorder %s91, %s92
      %p103 = scmp.eq.s32.totalorder %s20, 0
      %p104 = por %p102, %p103
      %p105 = scmp.ne.s32.totalorder %s91, %s92
      %p106 = scmp.eq.s32.totalorder %s21, 1
      %p107 = por %p105, %p106
      %p109 = scmp.ne.s32.totalorder %s92, %s108
      %p110 = scmp.eq.s32.totalorder %s21, 0
      %p111 = por %p109, %p110
      %p112 = scmp.le.s32.totalorder 1, %s15
      %p113 = scmp.lt.s32.totalorder %s15, 3
      %p114 = pnand %p112, %p113
      %p115 = pneg %p114
      // Predicated region
      $region9: #{tpu_custom_call.1} parent=5 // pred_check
        _
      $region10: #{tpu_custom_call.1} parent=5 // pred_check_branch
        %117 = sbr.rel (%p114) target = $region12
      $region11: #{tpu_custom_call.1} parent=5 // pred_region
        %s118 = ssub.s32 %s15, 1
        // Predicated region
        $region13: #{tpu_custom_call.1} parent=11 // pred_check
          %p119 = pneg %p48
        $region14: #{tpu_custom_call.1} parent=11 // pred_check_branch
          %121 = sbr.rel (%p119) target = $region16
        $region15: #{tpu_custom_call.1} parent=11 // pred_region
          %s123 = ssub.s32 16, 16
          %124 = vsyncadd [#allocation6], %s123
          %127 = dma.hbm_to_smem %s0, 16, [#allocation3], [#allocation6]
        $region16: #{tpu_custom_call.1} parent=11 // pred_fallthru
          _
      $region12: #{tpu_custom_call.1} parent=5 // pred_fallthru
        _
      %p128 = scmp.lt.s32.totalorder %s15, 2
      // Predicated region
      $region17: #{tpu_custom_call.1} parent=5 // pred_check
        %p129 = pneg %p128
      $region18: #{tpu_custom_call.1} parent=5 // pred_check_branch
        %131 = sbr.rel (%p129) target = $region20
      $region19: #{tpu_custom_call.1} parent=5 // pred_region
        // Predicated region
        $region21: #{tpu_custom_call.1} parent=19 // pred_check
          %p132 = pneg %p70
        $region22: #{tpu_custom_call.1} parent=19 // pred_check_branch
          %134 = sbr.rel (%p132) target = $region24
        $region23: #{tpu_custom_call.1} parent=19 // pred_region
          %s135 = sand.u32 %s60, 1
          %s136 = scalar_lea.sflag [#allocation4], %s135
          %s137 = sand.u32 %s60, 1
          %s138 = smul.addr %s137, 64
          %s139 = scalar_lea.vmem [#allocation7], %s138
          %s140 = smul.u32 4, %s23
          %s142 = ssub.s32 1024, 1024
          %143 = vsyncadd %s136, %s142
          %s144 = smul.addr %s140, 2
          %s145 = smul.addr %s22, 8
          %s146 = sadd.s32 %s144, %s145
          %s147 = smul.addr %s146, 128
          %s148 = scalar_lea.hbm %s1, %s147
          %s149 = sshll.u32 %s139, 4
          %s150 = int_to_ptr.vmem [resolvable:$true] %s149
          %155 = dma.hbm_to_vmem [thread:$0]  %s148, 1024, %s150, %s136, 128, 128, 8
        $region24: #{tpu_custom_call.1} parent=19 // pred_fallthru
          _
      $region20: #{tpu_custom_call.1} parent=5 // pred_fallthru
        _
      %p156 = scmp.le.s32.totalorder 1, %s15
      %p157 = scmp.lt.s32.totalorder %s15, 3
      %p158 = pnand %p156, %p157
      %p159 = pneg %p158
      // Predicated region
      $region25: #{tpu_custom_call.1} parent=5 // pred_check
        _
      $region26: #{tpu_custom_call.1} parent=5 // pred_check_branch
        %161 = sbr.rel (%p158) target = $region28
      $region27: #{tpu_custom_call.1} parent=5 // pred_region
        %s162 = ssub.s32 %s15, 1
        // Predicated region
        $region29: #{tpu_custom_call.1} parent=27 // pred_check
          %p163 = pneg %p48
        $region30: #{tpu_custom_call.1} parent=27 // pred_check_branch
          %165 = sbr.rel (%p163) target = $region32
        $region31: #{tpu_custom_call.1} parent=27 // pred_region
          %166 = dma.done [#allocation6], 16
        $region32: #{tpu_custom_call.1} parent=27 // pred_fallthru
          _
        %s167 = sand.u32 %s63, 1
        %s168 = scalar_lea.sflag [#allocation4], %s167
        %s169 = sand.u32 %s63, 1
        %s170 = smul.addr %s169, 64
        %s171 = scalar_lea.vmem [#allocation7], %s170
        // Predicated region
        $region33: #{tpu_custom_call.1} parent=27 // pred_check
          %p172 = pneg %p76
        $region34: #{tpu_custom_call.1} parent=27 // pred_check_branch
          %174 = sbr.rel (%p172) target = $region36
        $region35: #{tpu_custom_call.1} parent=27 // pred_region
          %175 = dma.done %s168, 1024
        $region36: #{tpu_custom_call.1} parent=27 // pred_fallthru
          _
        %176 = sfence
        %p177 = pneg %p48
        %p178 = pneg %p45
        %s179 = sand.u32 %s63, 1
        %s180 = scalar_lea.sflag [#allocation4], %s179
        %s181 = sand.u32 %s63, 1
        %s182 = smul.addr %s181, 64
        %s183 = scalar_lea.vmem [#allocation7], %s182
        %p184 = pneg %p76
        %p185 = pneg %p73
        %p186 = pneg %p104
        %p187 = pneg %p101
        %s188 = sand.u32 %s91, 1
        %s189 = scalar_lea.sflag [#allocation5], %s188
        %s190 = sand.u32 %s91, 1
        %s191 = smul.addr %s190, 64
        %s192 = scalar_lea.vmem [#allocation8], %s191
        %s193 = smul.u32 4, %s25
        %s194 = smul.u32 4, %s25
        %vm195 = vcmask 146432
        %196 = vst.msk [vmem:[#allocation2] sm:$0xff] %vm195, 0.0
        %197 = vst.msk [vmem:[#allocation2 + $0x8] sm:$0xff] %vm195, 0.0
        %vm198 = vcmask 140288
        %199 = vst.msk [vmem:[#allocation2 + $0x10] sm:$0x3] %vm198, 0.0
        %200 = vst.msk [vmem:[#allocation2 + $0x18] sm:$0xff] %vm195, 0.0
        %201 = vst.msk [vmem:[#allocation2 + $0x20] sm:$0xff] %vm195, 0.0
        %202 = vst.msk [vmem:[#allocation2 + $0x28] sm:$0x3] %vm198, 0.0
        %203 = vst.msk [vmem:[#allocation2 + $0x30] sm:$0xff] %vm195, 0.0
        %204 = vst.msk [vmem:[#allocation2 + $0x38] sm:$0xff] %vm195, 0.0
        %205 = vst.msk [vmem:[#allocation2 + $0x40] sm:$0x3] %vm198, 0.0
        %206 = vst.msk [vmem:[#allocation2 + $0x48] sm:$0xff] %vm195, 0.0
        %207 = vst.msk [vmem:[#allocation2 + $0x50] sm:$0xff] %vm195, 0.0
        %208 = vst.msk [vmem:[#allocation2 + $0x58] sm:$0x3] %vm198, 0.0
        %v209 = vld [vmem:[%s171] sm:$0xff]
        %v210 = vld [vmem:[%s171 + $0x8] sm:$0xff]
        %v211 = vld [vmem:[%s171 + $0x10] sm:$0xff]
        %v212 = vld [vmem:[%s171 + $0x18] sm:$0xff]
        %v213 = vld [vmem:[%s171 + $0x20] sm:$0xff]
        %v214 = vld [vmem:[%s171 + $0x28] sm:$0xff]
        %v215 = vld [vmem:[%s171 + $0x30] sm:$0xff]
        %v216 = vld [vmem:[%s171 + $0x38] sm:$0xff]
        %225 = vrot.lane.b32.xlu0 %v209, 1
        %v226 = vpop.permute.xlu0 %225
        %227 = vrot.lane.b32.xlu0 %v210, 1
        %v228 = vpop.permute.xlu0 %227
        %229 = vrot.lane.b32.xlu0 %v211, 1
        %v230 = vpop.permute.xlu0 %229
        %231 = vrot.lane.b32.xlu0 %v212, 1
        %v232 = vpop.permute.xlu0 %231
        %233 = vrot.lane.b32.xlu0 %v213, 1
        %v234 = vpop.permute.xlu0 %233
        %235 = vrot.lane.b32.xlu0 %v214, 1
        %v236 = vpop.permute.xlu0 %235
        %237 = vrot.lane.b32.xlu0 %v215, 1
        %v238 = vpop.permute.xlu0 %237
        %239 = vrot.lane.b32.xlu0 %v216, 1
        %v240 = vpop.permute.xlu0 %239
        %vm249 = vcmask 138248
        %250 = vst.msk [vmem:[#allocation2 + $0x1] sm:$0xff] %vm249, %v226
        %251 = vst.msk [vmem:[#allocation2 + $0x9] sm:$0xff] %vm249, %v228
        %252 = vst.msk [vmem:[#allocation2 + $0x19] sm:$0xff] %vm249, %v230
        %253 = vst.msk [vmem:[#allocation2 + $0x21] sm:$0xff] %vm249, %v232
        %254 = vst.msk [vmem:[#allocation2 + $0x31] sm:$0xff] %vm249, %v234
        %255 = vst.msk [vmem:[#allocation2 + $0x39] sm:$0xff] %vm249, %v236
        %256 = vst.msk [vmem:[#allocation2 + $0x49] sm:$0xff] %vm249, %v238
        %257 = vst.msk [vmem:[#allocation2 + $0x51] sm:$0xff] %vm249, %v240
        %s258 = smul.u32 %s25, 36
        %s259 = sld [smem:[#allocation3 + %s258]]
        %v260 = vld [vmem:[#allocation2] sm:$0xff]
        %v261 = vld [vmem:[#allocation2 + $0x8] sm:$0xff]
        %v262 = vstv %s259
        %v263 = vmul.f32 %v262, %v260
        %v264 = vmul.f32 %v262, %v261
        %v265 = vadd.f32 %v263, 0.0
        %v266 = vadd.f32 %v264, 0.0
        %s267 = sadd.s32 %s258, 1
        %s268 = sld [smem:[#allocation3 + %s267]]
        %v269 = vstv %s268
        %v270 = vmul.f32 %v269, %v260
        %v271 = vmul.f32 %v269, %v261
        %274 = vrot.lane.b32.xlu0 %v270, 127
        %v275 = vpop.permute.xlu0 %274
        %276 = vrot.lane.b32.xlu0 %v271, 127
        %v277 = vpop.permute.xlu0 %276
        %v280 = vadd.f32 %v265, %v275
        %v281 = vadd.f32 %v266, %v277
        %s282 = sadd.s32 %s258, 2
        %s283 = sld [smem:[#allocation3 + %s282]]
        %v284 = vstv %s283
        %v285 = vmul.f32 %v284, %v260
        %v286 = vmul.f32 %v284, %v261
        %289 = vrot.lane.b32.xlu0 %v285, 126
        %v290 = vpop.permute.xlu0 %289
        %291 = vrot.lane.b32.xlu0 %v286, 126
        %v292 = vpop.permute.xlu0 %291
        %v295 = vadd.f32 %v280, %v290
        %v296 = vadd.f32 %v281, %v292
        %s297 = sadd.s32 %s258, 3
        %s298 = sld [smem:[#allocation3 + %s297]]
        %v299 = vld [vmem:[#allocation2 + $0x1] sm:$0xff]
        %v300 = vld [vmem:[#allocation2 + $0x9] sm:$0xff]
        %v301 = vstv %s298
        %v302 = vmul.f32 %v301, %v299
        %v303 = vmul.f32 %v301, %v300
        %v304 = vadd.f32 %v295, %v302
        %v305 = vadd.f32 %v296, %v303
        %s306 = sadd.s32 %s258, 4
        %s307 = sld [smem:[#allocation3 + %s306]]
        %v308 = vstv %s307
        %v309 = vmul.f32 %v308, %v299
        %v310 = vmul.f32 %v308, %v300
        %313 = vrot.lane.b32.xlu0 %v309, 127
        %v314 = vpop.permute.xlu0 %313
        %315 = vrot.lane.b32.xlu0 %v310, 127
        %v316 = vpop.permute.xlu0 %315
        %v319 = vadd.f32 %v304, %v314
        %v320 = vadd.f32 %v305, %v316
        %s321 = sadd.s32 %s258, 5
        %s322 = sld [smem:[#allocation3 + %s321]]
        %v323 = vstv %s322
        %v324 = vmul.f32 %v323, %v299
        %v325 = vmul.f32 %v323, %v300
        %328 = vrot.lane.b32.xlu0 %v324, 126
        %v329 = vpop.permute.xlu0 %328
        %330 = vrot.lane.b32.xlu0 %v325, 126
        %v331 = vpop.permute.xlu0 %330
        %v334 = vadd.f32 %v319, %v329
        %v335 = vadd.f32 %v320, %v331
        %s336 = sadd.s32 %s258, 6
        %s337 = sld [smem:[#allocation3 + %s336]]
        %v338 = vld [vmem:[#allocation2 + $0x2] sm:$0xff]
        %v339 = vld [vmem:[#allocation2 + $0xa] sm:$0xff]
        %v340 = vstv %s337
        %v341 = vmul.f32 %v340, %v338
        %v342 = vmul.f32 %v340, %v339
        %v343 = vadd.f32 %v334, %v341
        %v344 = vadd.f32 %v335, %v342
        %s345 = sadd.s32 %s258, 7
        %s346 = sld [smem:[#allocation3 + %s345]]
        %v347 = vstv %s346
        %v348 = vmul.f32 %v347, %v338
        %v349 = vmul.f32 %v347, %v339
        %352 = vrot.lane.b32.xlu0 %v348, 127
        %v353 = vpop.permute.xlu0 %352
        %354 = vrot.lane.b32.xlu0 %v349, 127
        %v355 = vpop.permute.xlu0 %354
        %v358 = vadd.f32 %v343, %v353
        %v359 = vadd.f32 %v344, %v355
        %s360 = sadd.s32 %s258, 8
        %s361 = sld [smem:[#allocation3 + %s360]]
        %v362 = vstv %s361
        %v363 = vmul.f32 %v362, %v338
        %v364 = vmul.f32 %v362, %v339
        %367 = vrot.lane.b32.xlu0 %v363, 126
        %v368 = vpop.permute.xlu0 %367
        %369 = vrot.lane.b32.xlu0 %v364, 126
        %v370 = vpop.permute.xlu0 %369
        %v373 = vadd.f32 %v358, %v368
        %v374 = vadd.f32 %v359, %v370
        %vm375 = vcmp.gt.f32.partialorder %v373, 0.0
        %vm376 = vcmp.gt.f32.partialorder %v374, 0.0
        %v377 = vmul.f32 %v373, 0.2
        %v378 = vmul.f32 %v374, 0.2
        %v379 = vsel %vm375, %v373, %v377
        %v380 = vsel %vm376, %v374, %v378
        %vm381 = vcmask 130048
        %382 = vst.msk [vmem:[%s192] sm:$0xff] %vm381, %v379
        %383 = vst.msk [vmem:[%s192 + $0x8] sm:$0xff] %vm381, %v380
        %s384 = smul.u32 %s25, 4
        %s385 = sadd.s32 %s384, 1
        %s386 = smul.u32 %s385, 9
        %s387 = sld [smem:[#allocation3 + %s386]]
        %s388 = scalar_lea.vmem [#allocation2], 24
        %v389 = vld [vmem:[%s388] sm:$0xff]
        %v390 = vld [vmem:[%s388 + $0x8] sm:$0xff]
        %v391 = vstv %s387
        %v392 = vmul.f32 %v391, %v389
        %v393 = vmul.f32 %v391, %v390
        %v394 = vadd.f32 %v392, 0.0
        %v395 = vadd.f32 %v393, 0.0
        %s396 = sadd.s32 %s386, 1
        %s397 = sld [smem:[#allocation3 + %s396]]
        %v398 = vstv %s397
        %v399 = vmul.f32 %v398, %v389
        %v400 = vmul.f32 %v398, %v390
        %403 = vrot.lane.b32.xlu0 %v399, 127
        %v404 = vpop.permute.xlu0 %403
        %405 = vrot.lane.b32.xlu0 %v400, 127
        %v406 = vpop.permute.xlu0 %405
        %v409 = vadd.f32 %v394, %v404
        %v410 = vadd.f32 %v395, %v406
        %s411 = sadd.s32 %s386, 2
        %s412 = sld [smem:[#allocation3 + %s411]]
        %v413 = vstv %s412
        %v414 = vmul.f32 %v413, %v389
        %v415 = vmul.f32 %v413, %v390
        %418 = vrot.lane.b32.xlu0 %v414, 126
        %v419 = vpop.permute.xlu0 %418
        %420 = vrot.lane.b32.xlu0 %v415, 126
        %v421 = vpop.permute.xlu0 %420
        %v424 = vadd.f32 %v409, %v419
        %v425 = vadd.f32 %v410, %v421
        %s426 = sadd.s32 %s386, 3
        %s427 = sld [smem:[#allocation3 + %s426]]
        %v428 = vld [vmem:[%s388 + $0x1] sm:$0xff]
        %v429 = vld [vmem:[%s388 + $0x9] sm:$0xff]
        %v430 = vstv %s427
        %v431 = vmul.f32 %v430, %v428
        %v432 = vmul.f32 %v430, %v429
        %v433 = vadd.f32 %v424, %v431
        %v434 = vadd.f32 %v425, %v432
        %s435 = sadd.s32 %s386, 4
        %s436 = sld [smem:[#allocation3 + %s435]]
        %v437 = vstv %s436
        %v438 = vmul.f32 %v437, %v428
        %v439 = vmul.f32 %v437, %v429
        %442 = vrot.lane.b32.xlu0 %v438, 127
        %v443 = vpop.permute.xlu0 %442
        %444 = vrot.lane.b32.xlu0 %v439, 127
        %v445 = vpop.permute.xlu0 %444
        %v448 = vadd.f32 %v433, %v443
        %v449 = vadd.f32 %v434, %v445
        %s450 = sadd.s32 %s386, 5
        %s451 = sld [smem:[#allocation3 + %s450]]
        %v452 = vstv %s451
        %v453 = vmul.f32 %v452, %v428
        %v454 = vmul.f32 %v452, %v429
        %457 = vrot.lane.b32.xlu0 %v453, 126
        %v458 = vpop.permute.xlu0 %457
        %459 = vrot.lane.b32.xlu0 %v454, 126
        %v460 = vpop.permute.xlu0 %459
        %v463 = vadd.f32 %v448, %v458
        %v464 = vadd.f32 %v449, %v460
        %s465 = sadd.s32 %s386, 6
        %s466 = sld [smem:[#allocation3 + %s465]]
        %v467 = vld [vmem:[%s388 + $0x2] sm:$0xff]
        %v468 = vld [vmem:[%s388 + $0xa] sm:$0xff]
        %v469 = vstv %s466
        %v470 = vmul.f32 %v469, %v467
        %v471 = vmul.f32 %v469, %v468
        %v472 = vadd.f32 %v463, %v470
        %v473 = vadd.f32 %v464, %v471
        %s474 = sadd.s32 %s386, 7
        %s475 = sld [smem:[#allocation3 + %s474]]
        %v476 = vstv %s475
        %v477 = vmul.f32 %v476, %v467
        %v478 = vmul.f32 %v476, %v468
        %481 = vrot.lane.b32.xlu0 %v477, 127
        %v482 = vpop.permute.xlu0 %481
        %483 = vrot.lane.b32.xlu0 %v478, 127
        %v484 = vpop.permute.xlu0 %483
        %v487 = vadd.f32 %v472, %v482
        %v488 = vadd.f32 %v473, %v484
        %s489 = sadd.s32 %s386, 8
        %s490 = sld [smem:[#allocation3 + %s489]]
        %v491 = vstv %s490
        %v492 = vmul.f32 %v491, %v467
        %v493 = vmul.f32 %v491, %v468
        %496 = vrot.lane.b32.xlu0 %v492, 126
        %v497 = vpop.permute.xlu0 %496
        %498 = vrot.lane.b32.xlu0 %v493, 126
        %v499 = vpop.permute.xlu0 %498
        %v502 = vadd.f32 %v487, %v497
        %v503 = vadd.f32 %v488, %v499
        %vm504 = vcmp.gt.f32.partialorder %v502, 0.0
        %vm505 = vcmp.gt.f32.partialorder %v503, 0.0
        %v506 = vmul.f32 %v502, 0.2
        %v507 = vmul.f32 %v503, 0.2
        %v508 = vsel %vm504, %v502, %v506
        %v509 = vsel %vm505, %v503, %v507
        %s510 = scalar_lea.vmem %s192, 16 [#allocation8]
        %511 = vst.msk [vmem:[%s510] sm:$0xff] %vm381, %v508
        %512 = vst.msk [vmem:[%s510 + $0x8] sm:$0xff] %vm381, %v509
        %s513 = sadd.s32 %s384, 2
        %s514 = smul.u32 %s513, 9
        %s515 = sld [smem:[#allocation3 + %s514]]
        %s516 = scalar_lea.vmem [#allocation2], 48
        %v517 = vld [vmem:[%s516] sm:$0xff]
        %v518 = vld [vmem:[%s516 + $0x8] sm:$0xff]
        %v519 = vstv %s515
        %v520 = vmul.f32 %v519, %v517
        %v521 = vmul.f32 %v519, %v518
        %v522 = vadd.f32 %v520, 0.0
        %v523 = vadd.f32 %v521, 0.0
        %s524 = sadd.s32 %s514, 1
        %s525 = sld [smem:[#allocation3 + %s524]]
        %v526 = vstv %s525
        %v527 = vmul.f32 %v526, %v517
        %v528 = vmul.f32 %v526, %v518
        %531 = vrot.lane.b32.xlu0 %v527, 127
        %v532 = vpop.permute.xlu0 %531
        %533 = vrot.lane.b32.xlu0 %v528, 127
        %v534 = vpop.permute.xlu0 %533
        %v537 = vadd.f32 %v522, %v532
        %v538 = vadd.f32 %v523, %v534
        %s539 = sadd.s32 %s514, 2
        %s540 = sld [smem:[#allocation3 + %s539]]
        %v541 = vstv %s540
        %v542 = vmul.f32 %v541, %v517
        %v543 = vmul.f32 %v541, %v518
        %546 = vrot.lane.b32.xlu0 %v542, 126
        %v547 = vpop.permute.xlu0 %546
        %548 = vrot.lane.b32.xlu0 %v543, 126
        %v549 = vpop.permute.xlu0 %548
        %v552 = vadd.f32 %v537, %v547
        %v553 = vadd.f32 %v538, %v549
        %s554 = sadd.s32 %s514, 3
        %s555 = sld [smem:[#allocation3 + %s554]]
        %v556 = vld [vmem:[%s516 + $0x1] sm:$0xff]
        %v557 = vld [vmem:[%s516 + $0x9] sm:$0xff]
        %v558 = vstv %s555
        %v559 = vmul.f32 %v558, %v556
        %v560 = vmul.f32 %v558, %v557
        %v561 = vadd.f32 %v552, %v559
        %v562 = vadd.f32 %v553, %v560
        %s563 = sadd.s32 %s514, 4
        %s564 = sld [smem:[#allocation3 + %s563]]
        %v565 = vstv %s564
        %v566 = vmul.f32 %v565, %v556
        %v567 = vmul.f32 %v565, %v557
        %570 = vrot.lane.b32.xlu0 %v566, 127
        %v571 = vpop.permute.xlu0 %570
        %572 = vrot.lane.b32.xlu0 %v567, 127
        %v573 = vpop.permute.xlu0 %572
        %v576 = vadd.f32 %v561, %v571
        %v577 = vadd.f32 %v562, %v573
        %s578 = sadd.s32 %s514, 5
        %s579 = sld [smem:[#allocation3 + %s578]]
        %v580 = vstv %s579
        %v581 = vmul.f32 %v580, %v556
        %v582 = vmul.f32 %v580, %v557
        %585 = vrot.lane.b32.xlu0 %v581, 126
        %v586 = vpop.permute.xlu0 %585
        %587 = vrot.lane.b32.xlu0 %v582, 126
        %v588 = vpop.permute.xlu0 %587
        %v591 = vadd.f32 %v576, %v586
        %v592 = vadd.f32 %v577, %v588
        %s593 = sadd.s32 %s514, 6
        %s594 = sld [smem:[#allocation3 + %s593]]
        %v595 = vld [vmem:[%s516 + $0x2] sm:$0xff]
        %v596 = vld [vmem:[%s516 + $0xa] sm:$0xff]
        %v597 = vstv %s594
        %v598 = vmul.f32 %v597, %v595
        %v599 = vmul.f32 %v597, %v596
        %v600 = vadd.f32 %v591, %v598
        %v601 = vadd.f32 %v592, %v599
        %s602 = sadd.s32 %s514, 7
        %s603 = sld [smem:[#allocation3 + %s602]]
        %v604 = vstv %s603
        %v605 = vmul.f32 %v604, %v595
        %v606 = vmul.f32 %v604, %v596
        %609 = vrot.lane.b32.xlu0 %v605, 127
        %v610 = vpop.permute.xlu0 %609
        %611 = vrot.lane.b32.xlu0 %v606, 127
        %v612 = vpop.permute.xlu0 %611
        %v615 = vadd.f32 %v600, %v610
        %v616 = vadd.f32 %v601, %v612
        %s617 = sadd.s32 %s514, 8
        %s618 = sld [smem:[#allocation3 + %s617]]
        %v619 = vstv %s618
        %v620 = vmul.f32 %v619, %v595
        %v621 = vmul.f32 %v619, %v596
        %624 = vrot.lane.b32.xlu0 %v620, 126
        %v625 = vpop.permute.xlu0 %624
        %626 = vrot.lane.b32.xlu0 %v621, 126
        %v627 = vpop.permute.xlu0 %626
        %v630 = vadd.f32 %v615, %v625
        %v631 = vadd.f32 %v616, %v627
        %vm632 = vcmp.gt.f32.partialorder %v630, 0.0
        %vm633 = vcmp.gt.f32.partialorder %v631, 0.0
        %v634 = vmul.f32 %v630, 0.2
        %v635 = vmul.f32 %v631, 0.2
        %v636 = vsel %vm632, %v630, %v634
        %v637 = vsel %vm633, %v631, %v635
        %s638 = scalar_lea.vmem %s192, 32 [#allocation8]
        %639 = vst.msk [vmem:[%s638] sm:$0xff] %vm381, %v636
        %640 = vst.msk [vmem:[%s638 + $0x8] sm:$0xff] %vm381, %v637
        %s641 = sadd.s32 %s384, 3
        %s642 = smul.u32 %s641, 9
        %s643 = sld [smem:[#allocation3 + %s642]]
        %s644 = scalar_lea.vmem [#allocation2], 72
        %v645 = vld [vmem:[%s644] sm:$0xff]
        %v646 = vld [vmem:[%s644 + $0x8] sm:$0xff]
        %v647 = vstv %s643
        %v648 = vmul.f32 %v647, %v645
        %v649 = vmul.f32 %v647, %v646
        %v650 = vadd.f32 %v648, 0.0
        %v651 = vadd.f32 %v649, 0.0
        %s652 = sadd.s32 %s642, 1
        %s653 = sld [smem:[#allocation3 + %s652]]
        %v654 = vstv %s653
        %v655 = vmul.f32 %v654, %v645
        %v656 = vmul.f32 %v654, %v646
        %659 = vrot.lane.b32.xlu0 %v655, 127
        %v660 = vpop.permute.xlu0 %659
        %661 = vrot.lane.b32.xlu0 %v656, 127
        %v662 = vpop.permute.xlu0 %661
        %v665 = vadd.f32 %v650, %v660
        %v666 = vadd.f32 %v651, %v662
        %s667 = sadd.s32 %s642, 2
        %s668 = sld [smem:[#allocation3 + %s667]]
        %v669 = vstv %s668
        %v670 = vmul.f32 %v669, %v645
        %v671 = vmul.f32 %v669, %v646
        %674 = vrot.lane.b32.xlu0 %v670, 126
        %v675 = vpop.permute.xlu0 %674
        %676 = vrot.lane.b32.xlu0 %v671, 126
        %v677 = vpop.permute.xlu0 %676
        %v680 = vadd.f32 %v665, %v675
        %v681 = vadd.f32 %v666, %v677
        %s682 = sadd.s32 %s642, 3
        %s683 = sld [smem:[#allocation3 + %s682]]
        %v684 = vld [vmem:[%s644 + $0x1] sm:$0xff]
        %v685 = vld [vmem:[%s644 + $0x9] sm:$0xff]
        %v686 = vstv %s683
        %v687 = vmul.f32 %v686, %v684
        %v688 = vmul.f32 %v686, %v685
        %v689 = vadd.f32 %v680, %v687
        %v690 = vadd.f32 %v681, %v688
        %s691 = sadd.s32 %s642, 4
        %s692 = sld [smem:[#allocation3 + %s691]]
        %v693 = vstv %s692
        %v694 = vmul.f32 %v693, %v684
        %v695 = vmul.f32 %v693, %v685
        %698 = vrot.lane.b32.xlu0 %v694, 127
        %v699 = vpop.permute.xlu0 %698
        %700 = vrot.lane.b32.xlu0 %v695, 127
        %v701 = vpop.permute.xlu0 %700
        %v704 = vadd.f32 %v689, %v699
        %v705 = vadd.f32 %v690, %v701
        %s706 = sadd.s32 %s642, 5
        %s707 = sld [smem:[#allocation3 + %s706]]
        %v708 = vstv %s707
        %v709 = vmul.f32 %v708, %v684
        %v710 = vmul.f32 %v708, %v685
        %713 = vrot.lane.b32.xlu0 %v709, 126
        %v714 = vpop.permute.xlu0 %713
        %715 = vrot.lane.b32.xlu0 %v710, 126
        %v716 = vpop.permute.xlu0 %715
        %v719 = vadd.f32 %v704, %v714
        %v720 = vadd.f32 %v705, %v716
        %s721 = sadd.s32 %s642, 6
        %s722 = sld [smem:[#allocation3 + %s721]]
        %v723 = vld [vmem:[%s644 + $0x2] sm:$0xff]
        %v724 = vld [vmem:[%s644 + $0xa] sm:$0xff]
        %v725 = vstv %s722
        %v726 = vmul.f32 %v725, %v723
        %v727 = vmul.f32 %v725, %v724
        %v728 = vadd.f32 %v719, %v726
        %v729 = vadd.f32 %v720, %v727
        %s730 = sadd.s32 %s642, 7
        %s731 = sld [smem:[#allocation3 + %s730]]
        %v732 = vstv %s731
        %v733 = vmul.f32 %v732, %v723
        %v734 = vmul.f32 %v732, %v724
        %737 = vrot.lane.b32.xlu0 %v733, 127
        %v738 = vpop.permute.xlu0 %737
        %739 = vrot.lane.b32.xlu0 %v734, 127
        %v740 = vpop.permute.xlu0 %739
        %v743 = vadd.f32 %v728, %v738
        %v744 = vadd.f32 %v729, %v740
        %s745 = sadd.s32 %s642, 8
        %s746 = sld [smem:[#allocation3 + %s745]]
        %v747 = vstv %s746
        %v748 = vmul.f32 %v747, %v723
        %v749 = vmul.f32 %v747, %v724
        %752 = vrot.lane.b32.xlu0 %v748, 126
        %v753 = vpop.permute.xlu0 %752
        %754 = vrot.lane.b32.xlu0 %v749, 126
        %v755 = vpop.permute.xlu0 %754
        %v758 = vadd.f32 %v743, %v753
        %v759 = vadd.f32 %v744, %v755
        %vm760 = vcmp.gt.f32.partialorder %v758, 0.0
        %vm761 = vcmp.gt.f32.partialorder %v759, 0.0
        %v762 = vmul.f32 %v758, 0.2
        %v763 = vmul.f32 %v759, 0.2
        %v764 = vsel %vm760, %v758, %v762
        %v765 = vsel %vm761, %v759, %v763
        %s766 = scalar_lea.vmem %s192, 48 [#allocation8]
        %767 = vst.msk [vmem:[%s766] sm:$0xff] %vm381, %v764
        %768 = vst.msk [vmem:[%s766 + $0x8] sm:$0xff] %vm381, %v765
        %s769 = sand.u32 %s91, 1
        %s770 = scalar_lea.sflag [#allocation5], %s769
        %s771 = sand.u32 %s91, 1
        %s772 = smul.addr %s771, 64
        %s773 = scalar_lea.vmem [#allocation8], %s772
        // Predicated region
        $region37: #{tpu_custom_call.1} parent=27 // pred_check
          %p774 = pneg %p101
        $region38: #{tpu_custom_call.1} parent=27 // pred_check_branch
          %776 = sbr.rel (%p774) target = $region40
        $region39: #{tpu_custom_call.1} parent=27 // pred_region
          %s777 = smul.u32 4, %s25
          %s779 = ssub.s32 1024, 1024
          %780 = vsyncadd %s770, %s779
          %s781 = smul.addr %s777, 2
          %s782 = smul.addr %s24, 8
          %s783 = sadd.s32 %s781, %s782
          %s784 = smul.addr %s783, 128
          %s785 = scalar_lea.hbm %s2, %s784
          %s786 = sshll.u32 %s773, 4
          %s787 = int_to_ptr.vmem [resolvable:$true] %s786
          %792 = dma.vmem_to_hbm [thread:$0]  %s787, 1024, %s785, %s770, 128, 128, 8
        $region40: #{tpu_custom_call.1} parent=27 // pred_fallthru
          _
      $region28: #{tpu_custom_call.1} parent=5 // pred_fallthru
        _
      %p793 = scmp.le.s32.totalorder 2, %s15
      // Predicated region
      $region41: #{tpu_custom_call.1} parent=5 // pred_check
        %p794 = pneg %p793
      $region42: #{tpu_custom_call.1} parent=5 // pred_check_branch
        %796 = sbr.rel (%p794) target = $region44
      $region43: #{tpu_custom_call.1} parent=5 // pred_region
        %s797 = ssub.s32 %s15, 2
        // Predicated region
        $region45: #{tpu_custom_call.1} parent=43 // pred_check
          %p798 = pneg %p107
        $region46: #{tpu_custom_call.1} parent=43 // pred_check_branch
          %800 = sbr.rel (%p798) target = $region48
        $region47: #{tpu_custom_call.1} parent=43 // pred_region
          %s801 = sand.u32 %s92, 1
          %s802 = scalar_lea.sflag [#allocation5], %s801
          %s803 = sand.u32 %s92, 1
          %s804 = smul.addr %s803, 64
          %s805 = scalar_lea.vmem [#allocation8], %s804
          %806 = dma.done %s802, 1024
        $region48: #{tpu_custom_call.1} parent=43 // pred_fallthru
          _
      $region44: #{tpu_custom_call.1} parent=5 // pred_fallthru
        _
    $region6: #{tpu_custom_call.1} parent=1 // loop_footer
      %s19 = sadd.s32 1, %s15
    $region7: #{tpu_custom_call.1} parent=1 // loop_footer_branch
      %14 = sbr.rel target = $region3
    $region8: #{tpu_custom_call.1} parent=1 // loop_exit
      _
    %807 = vsyncpa [#allocation4], 1
    %s808 = scalar_lea.sflag [#allocation4], 1
    %809 = vsyncpa %s808, 1
    %810 = vsyncpa [#allocation5], 1
    %s811 = scalar_lea.sflag [#allocation5], 1
    %812 = vsyncpa %s811, 1
    %813 = vsyncpa [#allocation6], 1
    %s814 = scalar_lea.sflag [#allocation6], 1
    %815 = vsyncpa %s814, 1

</llo_original>
